<compile_context>
chip_gen: v7x
topology: tpu7x:2x2x1
jax: 0.10.0
libtpu: 0.0.40
codegen_flags: <defaults>
</compile_context>

<pallas_src>
import math

import jax
import jax.numpy as jnp
from jax.experimental import pallas as pl
from jax.experimental.pallas import tpu as pltpu


# ----------------------------- kernels ------------------------------------ #

def _hardshrink_real_kernel(x_ref, t_ref, o_ref):
    # x_ref: (TM, TW) lane-dense block; t_ref: (TM, 1) per-row |thresh|
    x = x_ref[...]
    t = t_ref[...]                                  # already abs()'d in wrapper
    o_ref[...] = jnp.where(jnp.abs(x) > t, x, jnp.zeros_like(x))


def _hardshrink_complex_kernel(xr_ref, xi_ref, t_ref, or_ref, oi_ref):
    # xr/xi: (TM, TW) de-interleaved real / imag planes; t: (TM, 1)
    xr = xr_ref[...]
    xi = xi_ref[...]
    t = t_ref[...]
    xr_f = xr.astype(jnp.float32)
    xi_f = xi.astype(jnp.float32)
    m = jnp.sqrt(xr_f * xr_f + xi_f * xi_f + 1e-6)  # keepdim magnitude
    keep = m > t
    zero = jnp.zeros_like(xr)
    or_ref[...] = jnp.where(keep, xr, zero)
    oi_ref[...] = jnp.where(keep, xi, zero)


# --------------------------- tiling helpers -------------------------------- #

def _pick_block(dim, align, max_size):
    """Largest divisor of `dim` that is a multiple of `align` and <= max_size.
    Falls back to the full dim (always legal for a BlockSpec) if none exists."""
    best = None
    d = align
    limit = min(dim, max_size)
    while d <= limit:
        if dim % d == 0:
            best = d
        d += align
    return best if best is not None else dim


# ----------------------------- wrapper ------------------------------------ #

def hard_shrink(x, thresh_param, complex=False):
    """Pallas implementation of HardShrink.forward.

    x:            (N, C, H, W)         if complex=False
                  (N, C, ..., 2)       if complex=True (e.g. (N, C, 6, H, W, 2))
    thresh_param: (C,) raw parameter (abs is taken, as in the module's property)
    """
    if x.size == 0:
        return x

    N, C = x.shape[0], x.shape[1]
    assert thresh_param.shape == (C,)
    t_abs = jnp.abs(thresh_param).astype(jnp.float32)

    R = N * C
    # Per-row threshold column (row = one (n, c) pair).
    t_col = jnp.broadcast_to(t_abs[None, :, None], (N, C, 1)).reshape(R, 1)

    if not complex:
        L = int(math.prod(x.shape[2:]))
        x2 = x.reshape(R, L)

        TM = _pick_block(R, 8, 128)
        TW = _pick_block(L, 128, 2048)
        grid = (R // TM, L // TW)

        out = pl.pallas_call(
            _hardshrink_real_kernel,
            out_shape=jax.ShapeDtypeStruct((R, L), x.dtype),
            grid_spec=pltpu.PrefetchScalarGridSpec(
                num_scalar_prefetch=0,
                grid=grid,
                in_specs=[
                    pl.BlockSpec((TM, TW), lambda i, j: (i, j)),
                    pl.BlockSpec((TM, 1), lambda i, j: (i, 0)),
                ],
                out_specs=pl.BlockSpec((TM, TW), lambda i, j: (i, j)),
            ),
            compiler_params=pltpu.CompilerParams(
                dimension_semantics=("parallel", "parallel")),
        )(x2, t_col)
        return out.reshape(x.shape)

    # ---- complex: last dim is the (real, imag) pair ----
    assert x.shape[-1] == 2
    L = int(math.prod(x.shape[2:-1]))
    xr = x[..., 0].reshape(R, L)
    xi = x[..., 1].reshape(R, L)

    TM = _pick_block(R, 8, 128)
    TW = _pick_block(L, 128, 2048)
    grid = (R // TM, L // TW)

    out_r, out_i = pl.pallas_call(
        _hardshrink_complex_kernel,
        out_shape=(jax.ShapeDtypeStruct((R, L), x.dtype),
                   jax.ShapeDtypeStruct((R, L), x.dtype)),
        grid_spec=pltpu.PrefetchScalarGridSpec(
            num_scalar_prefetch=0,
            grid=grid,
            in_specs=[
                pl.BlockSpec((TM, TW), lambda i, j: (i, j)),
                pl.BlockSpec((TM, TW), lambda i, j: (i, j)),
                pl.BlockSpec((TM, 1), lambda i, j: (i, 0)),
            ],
            out_specs=[
                pl.BlockSpec((TM, TW), lambda i, j: (i, j)),
                pl.BlockSpec((TM, TW), lambda i, j: (i, j)),
            ],
        ),
        compiler_params=pltpu.CompilerParams(
            dimension_semantics=("parallel", "parallel")),
    )(xr, xi, t_col)

    plane_shape = x.shape[:-1]
    return jnp.stack(
        [out_r.reshape(plane_shape), out_i.reshape(plane_shape)], axis=-1)


# ------------------------- pure-JAX reference ------------------------------ #

def hard_shrink_ref(x, thresh_param, complex=False):
    """Per-channel hard shrinkage (channel = dim 1), matching the module."""
    t = jnp.abs(thresh_param)
    C = x.shape[1]
    tb = t.reshape((1, C) + (1,) * (x.ndim - 2))
    if not complex:
        gain = (jnp.abs(x) > tb).astype(jnp.float32)
    else:
        m = jnp.sqrt(x[..., 0] ** 2 + x[..., 1] ** 2 + 1e-6)[..., None]
        gain = (m > tb).astype(jnp.float32)
    return (x * gain).astype(x.dtype)


# ------------------------------- main -------------------------------------- #

if __name__ == "__main__":
    key = jax.random.PRNGKey(0)
    k1, k2, k3, k4 = jax.random.split(key, 4)

    N, C, H, W = 2, 4, 16, 16

    # Parameter may contain negative values (the module takes abs of it).
    thresh_param = jax.random.normal(k1, (C,), dtype=jnp.float32)

    # ---- real case: (N, C, H, W) ----
    x_real = jax.random.normal(k2, (N, C, H, W), dtype=jnp.float32) * 2.0
    y_real = jax.block_until_ready(
        hard_shrink(x_real, thresh_param, complex=False))
    y_real_ref = hard_shrink_ref(x_real, thresh_param, complex=False)
    assert y_real.shape == x_real.shape and y_real.dtype == x_real.dtype
    assert jnp.allclose(y_real, y_real_ref, atol=1e-6), "real mismatch"

    # ---- complex case: dtcwt-style highpass (N, C, 6, H, W, 2) ----
    x_cplx = jax.random.normal(k3, (N, C, 6, 8, 8, 2), dtype=jnp.float32) * 2.0
    thresh_param_c = jax.random.normal(k4, (C,), dtype=jnp.float32)
    y_cplx = jax.block_until_ready(
        hard_shrink(x_cplx, thresh_param_c, complex=True))
    y_cplx_ref = hard_shrink_ref(x_cplx, thresh_param_c, complex=True)
    assert y_cplx.shape == x_cplx.shape and y_cplx.dtype == x_cplx.dtype
    assert jnp.allclose(y_cplx, y_cplx_ref, atol=1e-6), "complex mismatch"

    print("KERNEL_OK")
</pallas_src>

<mosaic_0001>
module attributes {stable_mosaic.version = 11 : i64} {
  func.func @_hardshrink_real_kernel(%arg0: i32, %arg1: i32, %arg2: memref<8x256xf32, #tpu.memory_space<vmem>>, %arg3: memref<8x1xf32, #tpu.memory_space<vmem>>, %arg4: memref<8x256xf32, #tpu.memory_space<vmem>>) attributes {dimension_semantics = [#tpu.dimension_semantics<parallel>, #tpu.dimension_semantics<parallel>], iteration_bounds = array<i64: 1, 1>, scalar_prefetch = 0 : i64, scratch_operands = 0 : i64, tpu.core_type = #tpu.core_type<tc>, window_params = [{transform_indices = @transform_0, window_bounds = array<i64: 8, 256>}, {transform_indices = @transform_1, window_bounds = array<i64: 8, 1>}, {transform_indices = @transform_2, window_bounds = array<i64: 8, 256>}]} {
    %c0 = arith.constant 0 : index
    %c0_0 = arith.constant 0 : index
    %0 = vector.load %arg2[%c0, %c0_0] : memref<8x256xf32, #tpu.memory_space<vmem>>, vector<8x256xf32>
    %c0_1 = arith.constant 0 : index
    %c0_2 = arith.constant 0 : index
    %1 = vector.load %arg3[%c0_1, %c0_2] : memref<8x1xf32, #tpu.memory_space<vmem>>, vector<8x1xf32>
    %2 = math.absf %0 : vector<8x256xf32>
    %3 = vector.broadcast %1 : vector<8x1xf32> to vector<8x256xf32>
    %4 = arith.cmpf ogt, %2, %3 : vector<8x256xf32>
    %cst = arith.constant 0.000000e+00 : f32
    %5 = vector.broadcast %cst : f32 to vector<8x256xf32>
    %6 = arith.select %4, %0, %5 : vector<8x256xi1>, vector<8x256xf32>
    %c0_3 = arith.constant 0 : index
    %c0_4 = arith.constant 0 : index
    %7 = vector.load %arg4[%c0_3, %c0_4] : memref<8x256xf32, #tpu.memory_space<vmem>>, vector<8x256xf32>
    tpu.vector_store %arg4[%c0_3, %c0_4], %6 {strides = array<i32>} : memref<8x256xf32, #tpu.memory_space<vmem>>, vector<8x256xf32>,
    return
  }
  func.func @transform_0(%arg0: i32, %arg1: i32) -> (i32, i32) {
    %c0_i32 = arith.constant 0 : i32
    return %arg0, %arg1 : i32, i32
  }
  func.func @transform_1(%arg0: i32, %arg1: i32) -> (i32, i32) {
    %c0_i32 = arith.constant 0 : i32
    %c0_i32_0 = arith.constant 0 : i32
    return %arg0, %c0_i32 : i32, i32
  }
  func.func @transform_2(%arg0: i32, %arg1: i32) -> (i32, i32) {
    %c0_i32 = arith.constant 0 : i32
    return %arg0, %arg1 : i32, i32
  }
}

</mosaic_0001>

<llo_original>
// kernel: tpu_custom_call.1
$region0: #{tpu_custom_call.1}
  #allocation0 [shape = 'u32[]', space=smem, size = 0x4, offset = 0x4, fixed_abs, tag = 'smem constant byte address 0x4 - core index']
  #allocation1 [shape = 'u32[144,128]{1,0:T(1,128)}', space=vmem, size = 0x12000, scoped, tag = 'internal scratch']
  %s0 = inlined_call_operand.hbm [shape: f32[8,256], index: 0, kind: input, shape index: {}]
  %s1 = inlined_call_operand.vmem [shape: f32[8,1], index: 1, kind: input, shape index: {}]
  %s2 = inlined_call_operand.hbm [shape: f32[8,256], index: 2, kind: output, shape index: {}]
  %s3 = sld [smem:[#allocation0]]
  $region22: #{tpu_custom_call.1} parent=0
    _
  %s5 = ssub.s32 1, %s3
  %s6 = scalar_select 0, %s5, %s3
  $region1: #{tpu_custom_call.1} parent=0
    #allocation2 [shape = 'u8[8192]{0}', space=vmem, size = 0x2000, scoped, tag = 'input window, operand 0, single buffered']
    #allocation3 [shape = 's32[1]{0}', space=sflag, size = 0x4, scoped, tag = 'scoped memory for tpu_custom_call.1']
    #allocation4 [shape = 's32[1]{0}', space=sflag, size = 0x4, scoped, tag = 'scoped memory for tpu_custom_call.1']
    #allocation5 [shape = 'u8[8192]{0}', space=vmem, size = 0x2000, scoped, tag = 'output window, operand 0, single buffered']
    %7 = vsyncpa [#allocation3], 0
    %8 = vsyncpa [#allocation4], 0
    // Predicated region
    $region2: #{tpu_custom_call.1} parent=1 // pred_check
      _
    $region3: #{tpu_custom_call.1} parent=1 // pred_check_branch
      %10 = sbr.rel (0) target = $region5
    $region4: #{tpu_custom_call.1} parent=1 // pred_region
      %s12 = ssub.s32 256, 256
      %13 = vsyncadd [#allocation3], %s12
      %s15 = sshll.u32 [#allocation2], 4
      %s16 = int_to_ptr.vmem [resolvable:$true] %s15
      %18 = dma.hbm_to_vmem [thread:$0]  %s0, 256, %s16, [#allocation3]
    $region5: #{tpu_custom_call.1} parent=1 // pred_fallthru
      _
    // Predicated region
    $region6: #{tpu_custom_call.1} parent=1 // pred_check
      _
    $region7: #{tpu_custom_call.1} parent=1 // pred_check_branch
      %20 = sbr.rel (0) target = $region9
    $region8: #{tpu_custom_call.1} parent=1 // pred_region
      _
    $region9: #{tpu_custom_call.1} parent=1 // pred_fallthru
      _
    // Predicated region
    $region10: #{tpu_custom_call.1} parent=1 // pred_check
      _
    $region11: #{tpu_custom_call.1} parent=1 // pred_check_branch
      %22 = sbr.rel (0) target = $region13
    $region12: #{tpu_custom_call.1} parent=1 // pred_region
      %23 = dma.done [#allocation3], 256
    $region13: #{tpu_custom_call.1} parent=1 // pred_fallthru
      _
    %v24 = vld [vmem:[#allocation2] sm:$0xff]
    %v25 = vld [vmem:[#allocation2 + $0x8] sm:$0xff]
    %v26 = vld [vmem:[%s1] sm:$0xff]
    %v27 = vand.u32 2147483647, %v24
    %v28 = vand.u32 2147483647, %v25
    %30 = vset.pattern.permute.xlu0 0
    %31 = vperm.xlu0 %30, %v26
    %v32 = vpop.permute.xlu0 %31
    %vm34 = vcmp.gt.f32.partialorder %v27, %v32
    %vm35 = vcmp.gt.f32.partialorder %v28, %v32
    %v36 = vsel %vm34, %v24, 0.0
    %v37 = vsel %vm35, %v25, 0.0
    %38 = vst [vmem:[#allocation5] sm:$0xff] %v36
    %39 = vst [vmem:[#allocation5 + $0x8] sm:$0xff] %v37
    // Predicated region
    $region14: #{tpu_custom_call.1} parent=1 // pred_check
      _
    $region15: #{tpu_custom_call.1} parent=1 // pred_check_branch
      %41 = sbr.rel (0) target = $region17
    $region16: #{tpu_custom_call.1} parent=1 // pred_region
      %s43 = ssub.s32 256, 256
      %44 = vsyncadd [#allocation4], %s43
      %s46 = sshll.u32 [#allocation5], 4
      %s47 = int_to_ptr.vmem [resolvable:$true] %s46
      %49 = dma.vmem_to_hbm [thread:$0]  %s47, 256, %s2, [#allocation4]
    $region17: #{tpu_custom_call.1} parent=1 // pred_fallthru
      _
    // Predicated region
    $region18: #{tpu_custom_call.1} parent=1 // pred_check
      _
    $region19: #{tpu_custom_call.1} parent=1 // pred_check_branch
      %51 = sbr.rel (0) target = $region21
    $region20: #{tpu_custom_call.1} parent=1 // pred_region
      %52 = dma.done [#allocation4], 256
    $region21: #{tpu_custom_call.1} parent=1 // pred_fallthru
      _
    %53 = vsyncpa [#allocation3], 1
    %54 = vsyncpa [#allocation4], 1

</llo_original>
